<compile_context>
chip_gen: v5e
topology: v5e:2x2
jax: 0.10.0
libtpu: 0.0.40
codegen_flags: <defaults>
</compile_context>

<pallas_src>
import jax
import jax.numpy as jnp
from jax.experimental import pallas as pl
from jax.experimental.pallas import tpu as pltpu

_LANE = 128


def _mixup_kernel(lam_ref, x_ref, tgt_ref, xo_ref, to_ref):
    # lam_ref: SMEM (1,) f32 scalar-prefetch.
    # x_ref/xo_ref: VMEM (B, td) pixel tiles.  tgt_ref: VMEM (B, 1) int32 ids.
    # to_ref: VMEM (B, num_classes) mixed one-hot targets (resident block).
    lam = lam_ref[0]
    one_m = 1.0 - lam

    x = x_ref[...]
    x_rolled = jnp.roll(x, 1, axis=0)            # batch.roll(1, 0) -- sublane XLU, free
    xo_ref[...] = (x + one_m * (x_rolled - x)).astype(xo_ref.dtype)

    # Tiny one-hot target mix; cost is noise under the HBM bound.  Written every
    # grid step (same data) so it is safe under megacore "parallel" splitting.
    B, C = to_ref.shape
    classes = jax.lax.broadcasted_iota(jnp.int32, (B, C), 1)
    onehot = (classes == tgt_ref[...]).astype(jnp.float32)      # F.one_hot(...).to(dtype)
    oh_rolled = jnp.roll(onehot, 1, axis=0)                     # target.roll(1, 0)
    to_ref[...] = (onehot + one_m * (oh_rolled - onehot)).astype(to_ref.dtype)


def _vmem_capacity_bytes():
    try:
        return int(pltpu.get_tpu_info().vmem_capacity_bytes)
    except Exception:
        return 64 * 1024 * 1024          # conservative fallback (v7x per-core VMEM)


def _choose_tile(D, B, itemsize, vmem_cap):
    """Largest lane-aligned pixel tile whose double-buffered in+out blocks stay
    well inside VMEM on every TPU generation (v5e/v6e: 128 MiB, v7x: 64 MiB)."""
    budget = max(vmem_cap // 8, 1 << 20)                        # per-step working set
    max_td = max(_LANE, (budget // (4 * B * itemsize)) // _LANE * _LANE)
    cap = min(max_td, 2048)                                     # ~roofline by 1-2K tiles
    if D <= cap or D % _LANE != 0:
        if 4 * B * D * itemsize <= budget:
            return D                                            # whole row in one block
        return cap                                              # ragged tail block is masked
    for td in range(cap, _LANE - 1, -_LANE):                    # prefer a divisor of D
        if D % td == 0:
            return td
    return cap                                                  # masked-tail fallback


def random_mixup(batch, target, lam, num_classes):
    """batch: (B, C, H, W) float; target: (B,) int; lam: (1,) f32 (1.0 == not applied)."""
    B, C, H, W = batch.shape
    D = C * H * W
    x_flat = batch.reshape(B, D)
    tgt2d = target.astype(jnp.int32).reshape(B, 1)

    itemsize = jnp.dtype(batch.dtype).itemsize
    vmem_cap = _vmem_capacity_bytes()
    td = _choose_tile(D, B, itemsize, vmem_cap)
    grid = (pl.cdiv(D, td),)

    mixed_flat, mixed_target = pl.pallas_call(
        _mixup_kernel,
        out_shape=(jax.ShapeDtypeStruct((B, D), batch.dtype),
                   jax.ShapeDtypeStruct((B, num_classes), batch.dtype)),
        grid_spec=pltpu.PrefetchScalarGridSpec(
            num_scalar_prefetch=1,
            grid=grid,
            in_specs=[pl.BlockSpec((B, td), lambda j, lam: (0, j)),
                      pl.BlockSpec((B, 1), lambda j, lam: (0, 0))],
            out_specs=[pl.BlockSpec((B, td), lambda j, lam: (0, j)),
                       pl.BlockSpec((B, num_classes), lambda j, lam: (0, 0))],
        ),
        compiler_params=pltpu.CompilerParams(
            dimension_semantics=("parallel",),
            vmem_limit_bytes=int(min(vmem_cap // 2, 64 * 1024 * 1024))),
        # args are (lam, x_flat, tgt2d): alias x_flat -> mixed batch (in-place mix).
        input_output_aliases={1: 0},
    )(lam, x_flat, tgt2d)

    return mixed_flat.reshape(B, C, H, W), mixed_target


if __name__ == "__main__":
    num_classes = 10
    p, alpha = 0.5, 1.0

    key = jax.random.PRNGKey(0)
    kb, kt, kp, kl = jax.random.split(key, 4)

    batch = jax.random.normal(kb, (2, 4, 16, 16), dtype=jnp.float32)
    # Torch requires int64 targets; int32 class indices are semantically equivalent here.
    target = jax.random.randint(kt, (2,), 0, num_classes, dtype=jnp.int32)

    # Host-level randomness (glue, matches torch.rand(1) gate + Dirichlet([a, a]) draw):
    # apply with probability p, lambda ~ Beta(alpha, alpha); lam == 1.0 == "not applied".
    apply_mix = jax.random.uniform(kp) < p
    lam_beta = jax.random.beta(kl, alpha, alpha)
    lam = jnp.where(apply_mix, lam_beta, 1.0).astype(jnp.float32).reshape(1)

    mixed_batch, mixed_target = random_mixup(batch, target, lam, num_classes)
    jax.block_until_ready((mixed_batch, mixed_target))

    # Pure-JAX reference check of the forward semantics.
    onehot = jax.nn.one_hot(target, num_classes, dtype=batch.dtype)
    lmb = lam[0]
    ref_b = lmb * batch + (1.0 - lmb) * jnp.roll(batch, 1, axis=0)
    ref_t = lmb * onehot + (1.0 - lmb) * jnp.roll(onehot, 1, axis=0)
    assert mixed_batch.shape == (2, 4, 16, 16) and mixed_target.shape == (2, num_classes)
    assert jnp.allclose(mixed_batch, ref_b, atol=1e-5)
    assert jnp.allclose(mixed_target, ref_t, atol=1e-5)

    print("KERNEL_OK")
</pallas_src>

<mosaic_0001>
module attributes {stable_mosaic.version = 11 : i64} {
  func.func @_mixup_kernel(%arg0: i32, %arg1: memref<1xf32, #tpu.memory_space<smem>>, %arg2: memref<2x1024xf32, #tpu.memory_space<vmem>>, %arg3: memref<2x1xi32, #tpu.memory_space<vmem>>, %arg4: memref<2x1024xf32, #tpu.memory_space<vmem>>, %arg5: memref<2x10xf32, #tpu.memory_space<vmem>>) attributes {dimension_semantics = [#tpu.dimension_semantics<parallel>], iteration_bounds = array<i64: 1>, scalar_prefetch = 1 : i64, scratch_operands = 0 : i64, tpu.core_type = #tpu.core_type<tc>, window_params = [{transform_indices = @transform_0, window_bounds = array<i64: 2, 1024>}, {pipeline_mode = #tpu.pipeline_mode<synchronous>, transform_indices = @transform_1, window_bounds = array<i64: 2, 1>}, {transform_indices = @transform_2, window_bounds = array<i64: 2, 1024>}, {pipeline_mode = #tpu.pipeline_mode<synchronous>, transform_indices = @transform_3, window_bounds = array<i64: 2, 10>}]} {
    %c0 = arith.constant 0 : index
    %0 = memref.load %arg1[%c0] : memref<1xf32, #tpu.memory_space<smem>>
    %cst = arith.constant 1.000000e+00 : f32
    %1 = arith.subf %cst, %0 : f32
    %c0_0 = arith.constant 0 : index
    %c0_1 = arith.constant 0 : index
    %2 = vector.load %arg2[%c0_0, %c0_1] : memref<2x1024xf32, #tpu.memory_space<vmem>>, vector<2x1024xf32>
    %3 = vector.extract_strided_slice %2 {offsets = [1, 0], sizes = [1, 1024], strides = [1, 1]} : vector<2x1024xf32> to vector<1x1024xf32>
    %4 = vector.extract_strided_slice %2 {offsets = [0, 0], sizes = [1, 1024], strides = [1, 1]} : vector<2x1024xf32> to vector<1x1024xf32>
    %5 = tpu.concatenate %3, %4 in 0 : vector<1x1024xf32>, vector<1x1024xf32> -> vector<2x1024xf32>
    %6 = arith.subf %5, %2 : vector<2x1024xf32>
    %7 = vector.broadcast %1 : f32 to vector<2x1024xf32>
    %8 = arith.mulf %7, %6 : vector<2x1024xf32>
    %9 = arith.addf %2, %8 : vector<2x1024xf32>
    %c0_2 = arith.constant 0 : index
    %c0_3 = arith.constant 0 : index
    %10 = vector.load %arg4[%c0_2, %c0_3] : memref<2x1024xf32, #tpu.memory_space<vmem>>, vector<2x1024xf32>
    tpu.vector_store %arg4[%c0_2, %c0_3], %9 {strides = array<i32>} : memref<2x1024xf32, #tpu.memory_space<vmem>>, vector<2x1024xf32>,
    %11 = tpu.iota {dimensions = array<i32: 1>} : vector<2x10xi32>
    %c0_4 = arith.constant 0 : index
    %c0_5 = arith.constant 0 : index
    %12 = vector.load %arg3[%c0_4, %c0_5] : memref<2x1xi32, #tpu.memory_space<vmem>>, vector<2x1xi32>
    %13 = vector.broadcast %12 : vector<2x1xi32> to vector<2x10xi32>
    %14 = arith.cmpi eq, %11, %13 : vector<2x10xi32>
    %15 = arith.extui %14 : vector<2x10xi1> to vector<2x10xi32>
    %16 = arith.sitofp %15 : vector<2x10xi32> to vector<2x10xf32>
    %17 = vector.extract_strided_slice %16 {offsets = [1, 0], sizes = [1, 10], strides = [1, 1]} : vector<2x10xf32> to vector<1x10xf32>
    %18 = vector.extract_strided_slice %16 {offsets = [0, 0], sizes = [1, 10], strides = [1, 1]} : vector<2x10xf32> to vector<1x10xf32>
    %19 = tpu.concatenate %17, %18 in 0 : vector<1x10xf32>, vector<1x10xf32> -> vector<2x10xf32>
    %20 = arith.subf %19, %16 : vector<2x10xf32>
    %21 = vector.broadcast %1 : f32 to vector<2x10xf32>
    %22 = arith.mulf %21, %20 : vector<2x10xf32>
    %23 = arith.addf %16, %22 : vector<2x10xf32>
    %c0_6 = arith.constant 0 : index
    %c0_7 = arith.constant 0 : index
    %24 = vector.load %arg5[%c0_6, %c0_7] : memref<2x10xf32, #tpu.memory_space<vmem>>, vector<2x10xf32>
    tpu.vector_store %arg5[%c0_6, %c0_7], %23 {strides = array<i32>} : memref<2x10xf32, #tpu.memory_space<vmem>>, vector<2x10xf32>,
    return
  }
  func.func @transform_0(%arg0: i32, %arg1: memref<1xf32, #tpu.memory_space<smem>>) -> (i32, i32) {
    %c0_i32 = arith.constant 0 : i32
    %c0_i32_0 = arith.constant 0 : i32
    return %c0_i32, %arg0 : i32, i32
  }
  func.func @transform_1(%arg0: i32, %arg1: memref<1xf32, #tpu.memory_space<smem>>) -> (i32, i32) {
    %c0_i32 = arith.constant 0 : i32
    %c0_i32_0 = arith.constant 0 : i32
    %c0_i32_1 = arith.constant 0 : i32
    return %c0_i32, %c0_i32_0 : i32, i32
  }
  func.func @transform_2(%arg0: i32, %arg1: memref<1xf32, #tpu.memory_space<smem>>) -> (i32, i32) {
    %c0_i32 = arith.constant 0 : i32
    %c0_i32_0 = arith.constant 0 : i32
    return %c0_i32, %arg0 : i32, i32
  }
  func.func @transform_3(%arg0: i32, %arg1: memref<1xf32, #tpu.memory_space<smem>>) -> (i32, i32) {
    %c0_i32 = arith.constant 0 : i32
    %c0_i32_0 = arith.constant 0 : i32
    %c0_i32_1 = arith.constant 0 : i32
    return %c0_i32, %c0_i32_0 : i32, i32
  }
}

</mosaic_0001>

<llo_original>
// kernel: tpu_custom_call.1
$region0: #{tpu_custom_call.1}
  #allocation0 [shape = 'u32[]', space=smem, size = 0x4, offset = 0x4, fixed_abs, tag = 'smem constant byte address 0x4 - core index']
  #allocation1 [shape = 'u32[72,128]{1,0:T(1,128)}', space=vmem, size = 0x9000, scoped, tag = 'internal scratch']
  #allocation2 [shape = 's32[1]{0}', space=sflag, size = 0x4, scoped, tag = 'scoped memory for tpu_custom_call.1']
  #allocation3 [shape = 'f32[1]{0:T(128)S(6)}', space=smem, size = 0x200, scoped, tag = 'prefetched SMEM operand 0']
  %s0 = inlined_call_operand.<no memory space> [shape: f32[1], index: 0, kind: input, shape index: {}]
  %s1 = inlined_call_operand.hbm [shape: f32[2,1024], index: 1, kind: input, shape index: {}, may-alias: {1,3}]
  %s2 = inlined_call_operand.vmem [shape: s32[2,1], index: 2, kind: input, shape index: {}]
  %s3 = inlined_call_operand.hbm [shape: f32[2,1024], index: 3, kind: output, shape index: {0}, may-alias: {1,3}]
  %s4 = inlined_call_operand.hbm [shape: f32[2,10], index: 4, kind: output, shape index: {1}]
  %5 = xla_tuple %s3, %s4
  %s6 = sld [smem:[#allocation0]]
  $region30: #{tpu_custom_call.1} parent=0
    _
  %s8 = ssub.s32 1, %s6
  %s9 = scalar_select 0, %s8, %s6
  %10 = sst [smem:[#allocation3]] %s0
  $region1: #{tpu_custom_call.1} parent=0
    #allocation4 [shape = 'u8[8192]{0}', space=vmem, size = 0x2000, scoped, tag = 'input window, operand 1, single buffered']
    #allocation5 [shape = 's32[1]{0}', space=sflag, size = 0x4, scoped, tag = 'scoped memory for tpu_custom_call.1']
    #allocation6 [shape = 's32[1]{0}', space=sflag, size = 0x4, scoped, tag = 'scoped memory for tpu_custom_call.1']
    #allocation7 [shape = 'u8[8192]{0}', space=vmem, size = 0x2000, scoped, tag = 'output window, operand 0, single buffered']
    #allocation8 [shape = 'u8[1024]{0}', space=vmem, size = 0x400, scoped, tag = 'output window, operand 1, single buffered']
    #allocation9 [shape = 's32[1]{0}', space=sflag, size = 0x4, scoped, tag = 'scoped memory for tpu_custom_call.1']
    %11 = vsyncpa [#allocation5], 0
    %12 = vsyncpa [#allocation6], 0
    %13 = vsyncpa [#allocation9], 0
    // Predicated region
    $region2: #{tpu_custom_call.1} parent=1 // pred_check
      _
    $region3: #{tpu_custom_call.1} parent=1 // pred_check_branch
      %15 = sbr.rel (0) target = $region5
    $region4: #{tpu_custom_call.1} parent=1 // pred_region
      %17 = vsyncadd [#allocation5], 0
      %s19 = sshll.u32 %s1, 4
      %s20 = int_to_ptr.hbm [resolvable:$true] %s19
      %s21 = sshll.u32 [#allocation4], 4
      %s22 = int_to_ptr.vmem [resolvable:$true] %s21
      %24 = dma.hbm_to_vmem [thread:$0]  %s20, 256, %s22, [#allocation5]
    $region5: #{tpu_custom_call.1} parent=1 // pred_fallthru
      _
    // Predicated region
    $region6: #{tpu_custom_call.1} parent=1 // pred_check
      _
    $region7: #{tpu_custom_call.1} parent=1 // pred_check_branch
      %26 = sbr.rel (0) target = $region9
    $region8: #{tpu_custom_call.1} parent=1 // pred_region
      _
    $region9: #{tpu_custom_call.1} parent=1 // pred_fallthru
      _
    // Predicated region
    $region10: #{tpu_custom_call.1} parent=1 // pred_check
      _
    $region11: #{tpu_custom_call.1} parent=1 // pred_check_branch
      %28 = sbr.rel (0) target = $region13
    $region12: #{tpu_custom_call.1} parent=1 // pred_region
      %30 = dma.done [#allocation5], 256
    $region13: #{tpu_custom_call.1} parent=1 // pred_fallthru
      _
    %s31 = sld [smem:[#allocation3]]
    %s32 = ssub.f32 1.0, %s31
    %v33 = vld [vmem:[#allocation4] sm:$0xff]
    %v34 = vld [vmem:[#allocation4 + $0x8] sm:$0xff]
    %v37 = vperm.slane %v33, 1
    %v38 = vperm.slane %v33, 3
    %v39 = vperm.slane %v33, 5
    %v40 = vperm.slane %v33, 7
    %v41 = vperm.slane %v34, 1
    %v42 = vperm.slane %v34, 3
    %v43 = vperm.slane %v34, 5
    %v44 = vperm.slane %v34, 7
    %v53 = vperm.slane %v33, 0
    %v54 = vperm.slane %v33, 2
    %v55 = vperm.slane %v33, 4
    %v56 = vperm.slane %v33, 6
    %v57 = vperm.slane %v34, 0
    %v58 = vperm.slane %v34, 2
    %v59 = vperm.slane %v34, 4
    %v60 = vperm.slane %v34, 6
    %vm69 = vcmask 1040384
    %v70 = vsel %vm69, %v37, %v53
    %v71 = vsel %vm69, %v38, %v54
    %v72 = vsel %vm69, %v39, %v55
    %v73 = vsel %vm69, %v40, %v56
    %v74 = vsel %vm69, %v41, %v57
    %v75 = vsel %vm69, %v42, %v58
    %v76 = vsel %vm69, %v43, %v59
    %v77 = vsel %vm69, %v44, %v60
    %78 = vst [vmem:[#allocation1] ss:$4 sm:$0xff] %v33
    %s79 = scalar_lea.vmem [#allocation1], 32
    %80 = vst [vmem:[%s79] ss:$4 sm:$0xff] %v34
    %v81 = vld.sshfl [vmem:[#allocation1] sm:$0xff pattern:$0x73625140]
    %v82 = vld.sshfl [vmem:[#allocation1 + $0x8] sm:$0xff pattern:$0x73625140]
    %v83 = vld.sshfl [vmem:[#allocation1 + $0x10] sm:$0xff pattern:$0x73625140]
    %v84 = vld.sshfl [vmem:[#allocation1 + $0x18] sm:$0xff pattern:$0x73625140]
    %v85 = vld.sshfl [vmem:[#allocation1 + $0x20] sm:$0xff pattern:$0x73625140]
    %v86 = vld.sshfl [vmem:[#allocation1 + $0x28] sm:$0xff pattern:$0x73625140]
    %v87 = vld.sshfl [vmem:[#allocation1 + $0x30] sm:$0xff pattern:$0x73625140]
    %v88 = vld.sshfl [vmem:[#allocation1 + $0x38] sm:$0xff pattern:$0x73625140]
    %v97 = vsub.f32 %v70, %v81
    %v98 = vsub.f32 %v71, %v82
    %v99 = vsub.f32 %v72, %v83
    %v100 = vsub.f32 %v73, %v84
    %v101 = vsub.f32 %v74, %v85
    %v102 = vsub.f32 %v75, %v86
    %v103 = vsub.f32 %v76, %v87
    %v104 = vsub.f32 %v77, %v88
    %v105 = vstv %s32
    %v106 = vmul.f32 %v105, %v97
    %v107 = vmul.f32 %v105, %v98
    %v108 = vmul.f32 %v105, %v99
    %v109 = vmul.f32 %v105, %v100
    %v110 = vmul.f32 %v105, %v101
    %v111 = vmul.f32 %v105, %v102
    %v112 = vmul.f32 %v105, %v103
    %v113 = vmul.f32 %v105, %v104
    %v122 = vrot.slane %v107, 6
    %v123 = vrot.slane %v108, 4
    %v124 = vrot.slane %v109, 2
    %v125 = vrot.slane %v111, 6
    %v126 = vrot.slane %v112, 4
    %v127 = vrot.slane %v113, 2
    %vm128 = vcmask 1041408
    %v129 = vsel %vm128, %v106, %v122
    %vm130 = vcmask 1045508
    %v131 = vsel %vm130, %v123, %v124
    %vm132 = vcmask 1043456
    %v133 = vsel %vm132, %v129, %v131
    %v134 = vsel %vm128, %v110, %v125
    %v135 = vsel %vm130, %v126, %v127
    %v136 = vsel %vm132, %v134, %v135
    %v139 = vadd.f32 %v33, %v133
    %v140 = vadd.f32 %v34, %v136
    %141 = vst [vmem:[#allocation7] sm:$0xff] %v139
    %142 = vst [vmem:[#allocation7 + $0x8] sm:$0xff] %v140
    %v143 = vlaneseq
    %v144 = vand.u32 %v143, 127
    %v145 = vld [vmem:[%s2] sm:$0x3]
    %146 = vset.pattern.permute.xlu0 0
    %147 = vperm.xlu0 %146, %v145
    %v148 = vpop.permute.xlu0 %147
    %vm149 = vcmp.eq.s32.totalorder %v144, %v148
    %v150 = vsel %vm149, 1, 0
    %v151 = vcvt.s32.f32 %v150
    %v153 = vrot.slane %v151, 1
    %v155 = vrot.slane %v151, 7
    %v157 = vsel %vm69, %v153, %v155
    %v158 = vsub.f32 %v157, %v151
    %v159 = vmul.f32 %v105, %v158
    %v160 = vadd.f32 %v151, %v159
    %vm161 = vcmask 74752
    %162 = vst.msk [vmem:[#allocation8] sm:$0x3] %vm161, %v160
    // Predicated region
    $region14: #{tpu_custom_call.1} parent=1 // pred_check
      _
    $region15: #{tpu_custom_call.1} parent=1 // pred_check_branch
      %164 = sbr.rel (0) target = $region17
    $region16: #{tpu_custom_call.1} parent=1 // pred_region
      %166 = vsyncadd [#allocation6], 0
      %s168 = sshll.u32 [#allocation7], 4
      %s169 = int_to_ptr.vmem [resolvable:$true] %s168
      %s170 = sshll.u32 %s3, 4
      %s171 = int_to_ptr.hbm [resolvable:$true] %s170
      %173 = dma.vmem_to_hbm [thread:$0]  %s169, 256, %s171, [#allocation6]
    $region17: #{tpu_custom_call.1} parent=1 // pred_fallthru
      _
    // Predicated region
    $region18: #{tpu_custom_call.1} parent=1 // pred_check
      _
    $region19: #{tpu_custom_call.1} parent=1 // pred_check_branch
      %175 = sbr.rel (0) target = $region21
    $region20: #{tpu_custom_call.1} parent=1 // pred_region
      %177 = vsyncadd [#allocation9], 0
      %s179 = sshll.u32 [#allocation8], 4
      %s180 = int_to_ptr.vmem [resolvable:$true] %s179
      %s181 = sshll.u32 %s4, 4
      %s182 = int_to_ptr.hbm [resolvable:$true] %s181
      %184 = dma.vmem_to_hbm [thread:$0]  %s180, 32, %s182, [#allocation9]
    $region21: #{tpu_custom_call.1} parent=1 // pred_fallthru
      _
    // Predicated region
    $region22: #{tpu_custom_call.1} parent=1 // pred_check
      _
    $region23: #{tpu_custom_call.1} parent=1 // pred_check_branch
      %186 = sbr.rel (0) target = $region25
    $region24: #{tpu_custom_call.1} parent=1 // pred_region
      %188 = dma.done [#allocation6], 256
    $region25: #{tpu_custom_call.1} parent=1 // pred_fallthru
      _
    // Predicated region
    $region26: #{tpu_custom_call.1} parent=1 // pred_check
      _
    $region27: #{tpu_custom_call.1} parent=1 // pred_check_branch
      %190 = sbr.rel (0) target = $region29
    $region28: #{tpu_custom_call.1} parent=1 // pred_region
      %192 = dma.done [#allocation9], 32
    $region29: #{tpu_custom_call.1} parent=1 // pred_fallthru
      _
    %193 = vsyncpa [#allocation5], 1
    %194 = vsyncpa [#allocation6], 1
    %195 = vsyncpa [#allocation9], 1

</llo_original>
